<compile_context>
chip_gen: v7x
topology: tpu7x:2x2x1
jax: 0.10.0
libtpu: 0.0.40
codegen_flags: <defaults>
</compile_context>

<pallas_src>
import functools

import jax
import jax.numpy as jnp
from jax.experimental import pallas as pl
from jax.experimental.pallas import tpu as pltpu

LANES = 128     # lane width (last dim of every slab)
TR_MAX = 1024   # max sublane-rows per block: (4, 1024, 128) f32 = 2 MiB per input,
                # ~9 MiB double-buffered working set (fits v5e's 16 MiB scoped default;
                # pushing TR past this would require vmem_limit_bytes on v5e).


def _cdiv(a, b):
    return (a + b - 1) // b


def _round_up(x, m):
    return ((x + m - 1) // m) * m


def _compute_miou(p_ref, g_ref, eps):
    """p_ref/g_ref: (4, TR, 128) coord-major slabs -> miou of shape (TR, 128).

    giou = 1 - miou. Zero-padded boxes (all coords 0) give miou == 0.0 exactly.
    """
    x1, y1, x2, y2 = p_ref[0], p_ref[1], p_ref[2], p_ref[3]
    x1g, y1g, x2g, y2g = g_ref[0], g_ref[1], g_ref[2], g_ref[3]

    # --- bbox_overlap ---
    xkis1 = jnp.maximum(x1, x1g)
    ykis1 = jnp.maximum(y1, y1g)
    xkis2 = jnp.minimum(x2, x2g)
    ykis2 = jnp.minimum(y2, y2g)
    w_inter = jnp.maximum(xkis2 - xkis1, 0.0)
    h_inter = jnp.maximum(ykis2 - ykis1, 0.0)
    overlap = w_inter * h_inter
    area1 = (x2 - x1) * (y2 - y1)
    area2 = (x2g - x1g) * (y2g - y1g)
    union = area1 + area2 - overlap + eps
    # Reciprocal on the EUP (full precision; approx=True would exceed 1e-5 tol).
    iou = overlap * pl.reciprocal(union)

    # --- enclosing box ---
    xc1 = jnp.minimum(x1, x1g)
    yc1 = jnp.minimum(y1, y1g)
    xc2 = jnp.maximum(x2, x2g)
    yc2 = jnp.maximum(y2, y2g)
    area_c = (xc2 - xc1) * (yc2 - yc1) + eps
    return iou - (area_c - union) * pl.reciprocal(area_c)


def _giou_none_kernel(p_ref, g_ref, o_ref, *, eps):
    # p_ref/g_ref: (4, TR, 128); o_ref: (TR, 128) dense output slab.
    o_ref[...] = 1.0 - _compute_miou(p_ref, g_ref, eps)


def _miou_sum_kernel(p_ref, g_ref, o_ref, *, eps):
    # p_ref/g_ref: (4, TR, 128); o_ref: (8, 128) per-block partial sums of miou.
    # No padded-box masking needed: padded boxes contribute exactly 0.0.
    miou = _compute_miou(p_ref, g_ref, eps)                    # (TR, 128)
    tr = miou.shape[0]
    o_ref[...] = jnp.sum(miou.reshape(tr // 8, 8, LANES), axis=0)


class GIoULoss:
    """Pallas/TPU port of PPYoloE GIoULoss (forward only)."""

    def __init__(self, loss_weight=1.0, eps=1e-10, reduction='none'):
        assert reduction in ('none', 'mean', 'sum')
        self.loss_weight = loss_weight
        self.eps = eps
        self.reduction = reduction

    # ---- layout helpers -------------------------------------------------
    @staticmethod
    def _tiling(n):
        rows = max(_cdiv(max(n, 1), LANES), 1)       # ceil(n / 128)
        rows8 = _round_up(rows, 8)
        num_blocks = _cdiv(rows8, TR_MAX)
        # Keep >= 2 (even) balanced blocks when possible so the "parallel"
        # grid axis shards across v7x's two TensorCores.
        if rows8 >= 16:
            num_blocks = max(num_blocks, 2)
            num_blocks = _round_up(num_blocks, 2)
        tr = _round_up(_cdiv(rows8, num_blocks), 8)  # even split, 8-aligned
        rows_pad = num_blocks * tr
        return tr, rows_pad, num_blocks

    @staticmethod
    def _pack_coords(box_flat, rows_pad):
        """One fused pad+transpose per input: (N, 4) -> coord-major (4, rows, 128).

        flat box index = row * 128 + lane.
        """
        # TODO(synk): producing boxes coord-major upstream (or memory_space=pl.ANY
        # with in-kernel de-interleave) would remove even this remaining XLA pass.
        n = box_flat.shape[0]
        b = jnp.pad(box_flat.astype(jnp.float32),
                    ((0, rows_pad * LANES - n), (0, 0)))       # (rows*128, 4)
        return b.T.reshape(4, rows_pad, LANES)                 # (4, rows, 128)

    # ---- kernel launchers ------------------------------------------------
    def _giou_flat(self, pbox_flat, gbox_flat):
        n = pbox_flat.shape[0]
        tr, rows_pad, num_blocks = self._tiling(n)
        p = self._pack_coords(pbox_flat, rows_pad)
        g = self._pack_coords(gbox_flat, rows_pad)

        giou = pl.pallas_call(
            functools.partial(_giou_none_kernel, eps=self.eps),
            out_shape=jax.ShapeDtypeStruct((rows_pad, LANES), jnp.float32),
            grid_spec=pltpu.PrefetchScalarGridSpec(
                num_scalar_prefetch=0,
                grid=(num_blocks,),
                in_specs=[pl.BlockSpec((4, tr, LANES), lambda i: (0, i, 0)),
                          pl.BlockSpec((4, tr, LANES), lambda i: (0, i, 0))],
                out_specs=pl.BlockSpec((tr, LANES), lambda i: (i, 0)),
            ),
            compiler_params=pltpu.CompilerParams(
                dimension_semantics=("parallel",)),
        )(p, g)
        return giou.reshape(-1)[:n]                            # (N,)

    def _giou_fused_sum(self, pbox_flat, gbox_flat):
        """Fused in-kernel reduction: returns sum(giou) over all real boxes."""
        n = pbox_flat.shape[0]
        tr, rows_pad, num_blocks = self._tiling(n)
        p = self._pack_coords(pbox_flat, rows_pad)
        g = self._pack_coords(gbox_flat, rows_pad)

        partials = pl.pallas_call(
            functools.partial(_miou_sum_kernel, eps=self.eps),
            out_shape=jax.ShapeDtypeStruct((num_blocks * 8, LANES), jnp.float32),
            grid_spec=pltpu.PrefetchScalarGridSpec(
                num_scalar_prefetch=0,
                grid=(num_blocks,),
                in_specs=[pl.BlockSpec((4, tr, LANES), lambda i: (0, i, 0)),
                          pl.BlockSpec((4, tr, LANES), lambda i: (0, i, 0))],
                out_specs=pl.BlockSpec((8, LANES), lambda i: (i, 0)),
            ),
            compiler_params=pltpu.CompilerParams(
                dimension_semantics=("parallel",)),
        )(p, g)
        # sum(giou) over real boxes = n - sum(miou); padded boxes have miou == 0.0
        # exactly, so no per-step masking and no large pad-count cancellation.
        return jnp.float32(n) - jnp.sum(partials)

    # ---- forward ----------------------------------------------------------
    def __call__(self, pbox, gbox, iou_weight=1.0, loc_reweight=None):
        assert pbox.shape == gbox.shape and pbox.shape[-1] == 4
        lead_shape = pbox.shape[:-1]
        pbox_flat = pbox.reshape(-1, 4)
        gbox_flat = gbox.reshape(-1, 4)
        n = pbox_flat.shape[0]

        scalar_weight = jnp.ndim(iou_weight) == 0
        if (self.reduction in ('sum', 'mean') and loc_reweight is None
                and scalar_weight):
            # Fused reduction path: never materializes per-box giou in HBM.
            total = self._giou_fused_sum(pbox_flat, gbox_flat)
            if self.reduction == 'mean':
                total = total / n
            return total * iou_weight * self.loss_weight

        giou_flat = self._giou_flat(pbox_flat, gbox_flat)       # (N,)

        if loc_reweight is not None:
            # TODO(synk): loc_reweight branch kept in plain JAX glue
            # (elementwise reweighting, matches PyTorch with loc_thresh=0.9).
            miou = 1.0 - giou_flat
            lw = jnp.reshape(loc_reweight, (-1,)).astype(jnp.float32)
            loc_thresh = 0.9
            giou_flat = (1.0 - (1.0 - loc_thresh) * miou
                         - loc_thresh * miou * lw)

        # PyTorch: split(..., 1, dim=-1) keeps a trailing singleton dim.
        giou = giou_flat.reshape(lead_shape + (1,))

        if self.reduction == 'none':
            loss = giou
        elif self.reduction == 'sum':
            loss = jnp.sum(giou * iou_weight)
        else:  # 'mean'
            loss = jnp.mean(giou * iou_weight)
        return loss * self.loss_weight


def _reference_giou(pbox, gbox, eps=1e-10):
    """Pure-JAX reference matching the PyTorch forward (reduction='none')."""
    x1, y1, x2, y2 = jnp.split(pbox, 4, axis=-1)
    x1g, y1g, x2g, y2g = jnp.split(gbox, 4, axis=-1)
    xkis1 = jnp.maximum(x1, x1g); ykis1 = jnp.maximum(y1, y1g)
    xkis2 = jnp.minimum(x2, x2g); ykis2 = jnp.minimum(y2, y2g)
    w_inter = jnp.clip(xkis2 - xkis1, 0); h_inter = jnp.clip(ykis2 - ykis1, 0)
    overlap = w_inter * h_inter
    area1 = (x2 - x1) * (y2 - y1); area2 = (x2g - x1g) * (y2g - y1g)
    union = area1 + area2 - overlap + eps
    iou = overlap / union
    xc1 = jnp.minimum(x1, x1g); yc1 = jnp.minimum(y1, y1g)
    xc2 = jnp.maximum(x2, x2g); yc2 = jnp.maximum(y2, y2g)
    area_c = (xc2 - xc1) * (yc2 - yc1) + eps
    miou = iou - (area_c - union) / area_c
    return 1.0 - miou


def _make_boxes(key, shape_lead):
    k1, k2 = jax.random.split(key)
    xy = jax.random.uniform(k1, shape_lead + (2,), jnp.float32, 0.0, 10.0)
    wh = jax.random.uniform(k2, shape_lead + (2,), jnp.float32, 0.1, 5.0)
    return jnp.concatenate([xy, xy + wh], axis=-1)


if __name__ == "__main__":
    key = jax.random.PRNGKey(0)
    kp, kg = jax.random.split(key)

    # Small case: (B, A, 4) boxes, reduction='none' / 'sum' / 'mean'.
    B, A = 2, 8
    pbox = _make_boxes(kp, (B, A))
    gbox = _make_boxes(kg, (B, A))
    ref = _reference_giou(pbox, gbox)

    out = jax.block_until_ready(GIoULoss(reduction='none')(pbox, gbox))
    assert out.shape == (B, A, 1), out.shape
    assert jnp.allclose(out, ref, atol=1e-5, rtol=1e-5)

    out_sum = jax.block_until_ready(GIoULoss(reduction='sum')(pbox, gbox))
    assert jnp.allclose(out_sum, jnp.sum(ref), atol=1e-4, rtol=1e-5)

    out_mean = jax.block_until_ready(GIoULoss(reduction='mean')(pbox, gbox))
    assert jnp.allclose(out_mean, jnp.mean(ref), atol=1e-5, rtol=1e-5)

    # Larger case exercising multiple balanced grid blocks and row padding.
    N2 = 40000
    kp2, kg2 = jax.random.split(jax.random.PRNGKey(1))
    pbox2 = _make_boxes(kp2, (N2,))
    gbox2 = _make_boxes(kg2, (N2,))
    ref2 = _reference_giou(pbox2, gbox2)

    out2 = jax.block_until_ready(GIoULoss(reduction='none')(pbox2, gbox2))
    assert out2.shape == (N2, 1), out2.shape
    assert jnp.allclose(out2, ref2, atol=1e-5, rtol=1e-5)

    out2_mean = jax.block_until_ready(GIoULoss(reduction='mean')(pbox2, gbox2))
    assert jnp.allclose(out2_mean, jnp.mean(ref2), atol=1e-4, rtol=1e-4)

    print("KERNEL_OK")
</pallas_src>

<mosaic_0001>
module attributes {stable_mosaic.version = 11 : i64} {
  func.func @_giou_none_kernel(%arg0: i32, %arg1: memref<4x8x128xf32, #tpu.memory_space<vmem>>, %arg2: memref<4x8x128xf32, #tpu.memory_space<vmem>>, %arg3: memref<8x128xf32, #tpu.memory_space<vmem>>) attributes {dimension_semantics = [#tpu.dimension_semantics<parallel>], iteration_bounds = array<i64: 1>, scalar_prefetch = 0 : i64, scratch_operands = 0 : i64, tpu.core_type = #tpu.core_type<tc>, window_params = [{transform_indices = @transform_0, window_bounds = array<i64: 4, 8, 128>}, {transform_indices = @transform_1, window_bounds = array<i64: 4, 8, 128>}, {transform_indices = @transform_2, window_bounds = array<i64: 8, 128>}]} {
    %c0 = arith.constant 0 : index
    %c0_0 = arith.constant 0 : index
    %c0_1 = arith.constant 0 : index
    %0 = vector.load %arg1[%c0, %c0_0, %c0_1] : memref<4x8x128xf32, #tpu.memory_space<vmem>>, vector<1x8x128xf32>
    %1 = vector.shape_cast %0 : vector<1x8x128xf32> to vector<8x128xf32>
    %c1 = arith.constant 1 : index
    %c0_2 = arith.constant 0 : index
    %c0_3 = arith.constant 0 : index
    %2 = vector.load %arg1[%c1, %c0_2, %c0_3] : memref<4x8x128xf32, #tpu.memory_space<vmem>>, vector<1x8x128xf32>
    %3 = vector.shape_cast %2 : vector<1x8x128xf32> to vector<8x128xf32>
    %c2 = arith.constant 2 : index
    %c0_4 = arith.constant 0 : index
    %c0_5 = arith.constant 0 : index
    %4 = vector.load %arg1[%c2, %c0_4, %c0_5] : memref<4x8x128xf32, #tpu.memory_space<vmem>>, vector<1x8x128xf32>
    %5 = vector.shape_cast %4 : vector<1x8x128xf32> to vector<8x128xf32>
    %c3 = arith.constant 3 : index
    %c0_6 = arith.constant 0 : index
    %c0_7 = arith.constant 0 : index
    %6 = vector.load %arg1[%c3, %c0_6, %c0_7] : memref<4x8x128xf32, #tpu.memory_space<vmem>>, vector<1x8x128xf32>
    %7 = vector.shape_cast %6 : vector<1x8x128xf32> to vector<8x128xf32>
    %c0_8 = arith.constant 0 : index
    %c0_9 = arith.constant 0 : index
    %c0_10 = arith.constant 0 : index
    %8 = vector.load %arg2[%c0_8, %c0_9, %c0_10] : memref<4x8x128xf32, #tpu.memory_space<vmem>>, vector<1x8x128xf32>
    %9 = vector.shape_cast %8 : vector<1x8x128xf32> to vector<8x128xf32>
    %c1_11 = arith.constant 1 : index
    %c0_12 = arith.constant 0 : index
    %c0_13 = arith.constant 0 : index
    %10 = vector.load %arg2[%c1_11, %c0_12, %c0_13] : memref<4x8x128xf32, #tpu.memory_space<vmem>>, vector<1x8x128xf32>
    %11 = vector.shape_cast %10 : vector<1x8x128xf32> to vector<8x128xf32>
    %c2_14 = arith.constant 2 : index
    %c0_15 = arith.constant 0 : index
    %c0_16 = arith.constant 0 : index
    %12 = vector.load %arg2[%c2_14, %c0_15, %c0_16] : memref<4x8x128xf32, #tpu.memory_space<vmem>>, vector<1x8x128xf32>
    %13 = vector.shape_cast %12 : vector<1x8x128xf32> to vector<8x128xf32>
    %c3_17 = arith.constant 3 : index
    %c0_18 = arith.constant 0 : index
    %c0_19 = arith.constant 0 : index
    %14 = vector.load %arg2[%c3_17, %c0_18, %c0_19] : memref<4x8x128xf32, #tpu.memory_space<vmem>>, vector<1x8x128xf32>
    %15 = vector.shape_cast %14 : vector<1x8x128xf32> to vector<8x128xf32>
    %16 = arith.maximumf %1, %9 : vector<8x128xf32>
    %17 = arith.maximumf %3, %11 : vector<8x128xf32>
    %18 = arith.minimumf %5, %13 : vector<8x128xf32>
    %19 = arith.minimumf %7, %15 : vector<8x128xf32>
    %20 = arith.subf %18, %16 : vector<8x128xf32>
    %cst = arith.constant 0.000000e+00 : f32
    %21 = vector.broadcast %cst : f32 to vector<8x128xf32>
    %22 = arith.maximumf %20, %21 : vector<8x128xf32>
    %23 = arith.subf %19, %17 : vector<8x128xf32>
    %cst_20 = arith.constant 0.000000e+00 : f32
    %24 = vector.broadcast %cst_20 : f32 to vector<8x128xf32>
    %25 = arith.maximumf %23, %24 : vector<8x128xf32>
    %26 = arith.mulf %22, %25 : vector<8x128xf32>
    %27 = arith.subf %5, %1 : vector<8x128xf32>
    %28 = arith.subf %7, %3 : vector<8x128xf32>
    %29 = arith.mulf %27, %28 : vector<8x128xf32>
    %30 = arith.subf %13, %9 : vector<8x128xf32>
    %31 = arith.subf %15, %11 : vector<8x128xf32>
    %32 = arith.mulf %30, %31 : vector<8x128xf32>
    %33 = arith.addf %29, %32 : vector<8x128xf32>
    %34 = arith.subf %33, %26 : vector<8x128xf32>
    %cst_21 = arith.constant 1.000000e-10 : f32
    %35 = vector.broadcast %cst_21 : f32 to vector<8x128xf32>
    %36 = arith.addf %34, %35 : vector<8x128xf32>
    %37 = tpu.reciprocal %36 : vector<8x128xf32> -> vector<8x128xf32>
    %38 = arith.mulf %26, %37 : vector<8x128xf32>
    %39 = arith.minimumf %1, %9 : vector<8x128xf32>
    %40 = arith.minimumf %3, %11 : vector<8x128xf32>
    %41 = arith.maximumf %5, %13 : vector<8x128xf32>
    %42 = arith.maximumf %7, %15 : vector<8x128xf32>
    %43 = arith.subf %41, %39 : vector<8x128xf32>
    %44 = arith.subf %42, %40 : vector<8x128xf32>
    %45 = arith.mulf %43, %44 : vector<8x128xf32>
    %cst_22 = arith.constant 1.000000e-10 : f32
    %46 = vector.broadcast %cst_22 : f32 to vector<8x128xf32>
    %47 = arith.addf %45, %46 : vector<8x128xf32>
    %48 = arith.subf %47, %36 : vector<8x128xf32>
    %49 = tpu.reciprocal %47 : vector<8x128xf32> -> vector<8x128xf32>
    %50 = arith.mulf %48, %49 : vector<8x128xf32>
    %51 = arith.subf %38, %50 : vector<8x128xf32>
    %cst_23 = arith.constant 1.000000e+00 : f32
    %52 = vector.broadcast %cst_23 : f32 to vector<8x128xf32>
    %53 = arith.subf %52, %51 : vector<8x128xf32>
    %c0_24 = arith.constant 0 : index
    %c0_25 = arith.constant 0 : index
    %54 = vector.load %arg3[%c0_24, %c0_25] : memref<8x128xf32, #tpu.memory_space<vmem>>, vector<8x128xf32>
    tpu.vector_store %arg3[%c0_24, %c0_25], %53 {strides = array<i32>} : memref<8x128xf32, #tpu.memory_space<vmem>>, vector<8x128xf32>,
    return
  }
  func.func @transform_0(%arg0: i32) -> (i32, i32, i32) {
    %c0_i32 = arith.constant 0 : i32
    %c0_i32_0 = arith.constant 0 : i32
    %c0_i32_1 = arith.constant 0 : i32
    return %c0_i32, %arg0, %c0_i32_0 : i32, i32, i32
  }
  func.func @transform_1(%arg0: i32) -> (i32, i32, i32) {
    %c0_i32 = arith.constant 0 : i32
    %c0_i32_0 = arith.constant 0 : i32
    %c0_i32_1 = arith.constant 0 : i32
    return %c0_i32, %arg0, %c0_i32_0 : i32, i32, i32
  }
  func.func @transform_2(%arg0: i32) -> (i32, i32) {
    %c0_i32 = arith.constant 0 : i32
    %c0_i32_0 = arith.constant 0 : i32
    return %arg0, %c0_i32 : i32, i32
  }
}

</mosaic_0001>

<llo_original>
// kernel: tpu_custom_call.1
$region0: #{tpu_custom_call.1}
  #allocation0 [shape = 'u32[]', space=smem, size = 0x4, offset = 0x4, fixed_abs, tag = 'smem constant byte address 0x4 - core index']
  #allocation1 [shape = 'u32[144,128]{1,0:T(1,128)}', space=vmem, size = 0x12000, scoped, tag = 'internal scratch']
  %s0 = inlined_call_operand.hbm [shape: f32[4,8,128], index: 0, kind: input, shape index: {}]
  %s1 = inlined_call_operand.hbm [shape: f32[4,8,128], index: 1, kind: input, shape index: {}]
  %s2 = inlined_call_operand.hbm [shape: f32[8,128], index: 2, kind: output, shape index: {}]
  %s3 = sld [smem:[#allocation0]]
  $region26: #{tpu_custom_call.1} parent=0
    _
  %s5 = ssub.s32 1, %s3
  %s6 = scalar_select 0, %s5, %s3
  $region1: #{tpu_custom_call.1} parent=0
    #allocation2 [shape = 'u8[16384]{0}', space=vmem, size = 0x4000, scoped, tag = 'input window, operand 0, single buffered']
    #allocation3 [shape = 's32[1]{0}', space=sflag, size = 0x4, scoped, tag = 'scoped memory for tpu_custom_call.1']
    #allocation4 [shape = 's32[1]{0}', space=sflag, size = 0x4, scoped, tag = 'scoped memory for tpu_custom_call.1']
    #allocation5 [shape = 'u8[16384]{0}', space=vmem, size = 0x4000, scoped, tag = 'input window, operand 1, single buffered']
    #allocation6 [shape = 's32[1]{0}', space=sflag, size = 0x4, scoped, tag = 'scoped memory for tpu_custom_call.1']
    #allocation7 [shape = 'u8[4096]{0}', space=vmem, size = 0x1000, scoped, tag = 'output window, operand 0, single buffered']
    %7 = vsyncpa [#allocation3], 0
    %8 = vsyncpa [#allocation6], 0
    %9 = vsyncpa [#allocation4], 0
    // Predicated region
    $region2: #{tpu_custom_call.1} parent=1 // pred_check
      _
    $region3: #{tpu_custom_call.1} parent=1 // pred_check_branch
      %11 = sbr.rel (0) target = $region5
    $region4: #{tpu_custom_call.1} parent=1 // pred_region
      %s13 = ssub.s32 512, 512
      %14 = vsyncadd [#allocation3], %s13
      %s15 = sshll.u32 [#allocation2], 4
      %s16 = int_to_ptr.vmem [resolvable:$true] %s15
      %21 = dma.hbm_to_vmem [thread:$0]  %s0, 512, %s16, [#allocation3], 128, 128, 8
    $region5: #{tpu_custom_call.1} parent=1 // pred_fallthru
      _
    // Predicated region
    $region6: #{tpu_custom_call.1} parent=1 // pred_check
      _
    $region7: #{tpu_custom_call.1} parent=1 // pred_check_branch
      %23 = sbr.rel (0) target = $region9
    $region8: #{tpu_custom_call.1} parent=1 // pred_region
      %s25 = ssub.s32 512, 512
      %26 = vsyncadd [#allocation6], %s25
      %s27 = sshll.u32 [#allocation5], 4
      %s28 = int_to_ptr.vmem [resolvable:$true] %s27
      %33 = dma.hbm_to_vmem [thread:$0]  %s1, 512, %s28, [#allocation6], 128, 128, 8
    $region9: #{tpu_custom_call.1} parent=1 // pred_fallthru
      _
    // Predicated region
    $region10: #{tpu_custom_call.1} parent=1 // pred_check
      _
    $region11: #{tpu_custom_call.1} parent=1 // pred_check_branch
      %35 = sbr.rel (0) target = $region13
    $region12: #{tpu_custom_call.1} parent=1 // pred_region
      %36 = dma.done [#allocation3], 512
    $region13: #{tpu_custom_call.1} parent=1 // pred_fallthru
      _
    // Predicated region
    $region14: #{tpu_custom_call.1} parent=1 // pred_check
      _
    $region15: #{tpu_custom_call.1} parent=1 // pred_check_branch
      %38 = sbr.rel (0) target = $region17
    $region16: #{tpu_custom_call.1} parent=1 // pred_region
      %39 = dma.done [#allocation6], 512
    $region17: #{tpu_custom_call.1} parent=1 // pred_fallthru
      _
    %v40 = vld [vmem:[#allocation2] sm:$0xff]
    %s41 = scalar_lea.vmem [#allocation2], 8
    %v42 = vld [vmem:[%s41] sm:$0xff]
    %s43 = scalar_lea.vmem [#allocation2], 16
    %v44 = vld [vmem:[%s43] sm:$0xff]
    %s45 = scalar_lea.vmem [#allocation2], 24
    %v46 = vld [vmem:[%s45] sm:$0xff]
    %v47 = vld [vmem:[#allocation5] sm:$0xff]
    %s48 = scalar_lea.vmem [#allocation5], 8
    %v49 = vld [vmem:[%s48] sm:$0xff]
    %s50 = scalar_lea.vmem [#allocation5], 16
    %v51 = vld [vmem:[%s50] sm:$0xff]
    %s52 = scalar_lea.vmem [#allocation5], 24
    %v53 = vld [vmem:[%s52] sm:$0xff]
    %v54 = vmax.f32 %v40, %v47
    %v55 = vmax.f32 %v42, %v49
    %v56 = vmin.f32 %v44, %v51
    %v57 = vmin.f32 %v46, %v53
    %v58 = vsub.f32 %v56, %v54
    %v59 = vmax.f32 %v58, 0.0
    %v60 = vsub.f32 %v57, %v55
    %v61 = vmax.f32 %v60, 0.0
    %v62 = vmul.f32 %v59, %v61
    %v63 = vsub.f32 %v44, %v40
    %v64 = vsub.f32 %v46, %v42
    %v65 = vmul.f32 %v63, %v64
    %v66 = vsub.f32 %v51, %v47
    %v67 = vsub.f32 %v53, %v49
    %v68 = vmul.f32 %v66, %v67
    %v69 = vadd.f32 %v65, %v68
    %v70 = vsub.f32 %v69, %v62
    %v71 = vadd.f32 %v70, 1e-10
    %v72 = vrcp.pop %v71
    %v73 = vmul.f32 %v62, %v72
    %v74 = vmin.f32 %v40, %v47
    %v75 = vmin.f32 %v42, %v49
    %v76 = vmax.f32 %v44, %v51
    %v77 = vmax.f32 %v46, %v53
    %v78 = vsub.f32 %v76, %v74
    %v79 = vsub.f32 %v77, %v75
    %v80 = vmul.f32 %v78, %v79
    %v81 = vadd.f32 %v80, 1e-10
    %v82 = vsub.f32 %v81, %v71
    %v83 = vrcp.pop %v81
    %v84 = vmul.f32 %v82, %v83
    %v85 = vsub.f32 %v73, %v84
    %v86 = vsub.f32 1.0, %v85
    %87 = vst [vmem:[#allocation7] sm:$0xff] %v86
    // Predicated region
    $region18: #{tpu_custom_call.1} parent=1 // pred_check
      _
    $region19: #{tpu_custom_call.1} parent=1 // pred_check_branch
      %89 = sbr.rel (0) target = $region21
    $region20: #{tpu_custom_call.1} parent=1 // pred_region
      %s91 = ssub.s32 128, 128
      %92 = vsyncadd [#allocation4], %s91
      %s94 = sshll.u32 [#allocation7], 4
      %s95 = int_to_ptr.vmem [resolvable:$true] %s94
      %97 = dma.vmem_to_hbm [thread:$0]  %s95, 128, %s2, [#allocation4]
    $region21: #{tpu_custom_call.1} parent=1 // pred_fallthru
      _
    // Predicated region
    $region22: #{tpu_custom_call.1} parent=1 // pred_check
      _
    $region23: #{tpu_custom_call.1} parent=1 // pred_check_branch
      %99 = sbr.rel (0) target = $region25
    $region24: #{tpu_custom_call.1} parent=1 // pred_region
      %100 = dma.done [#allocation4], 128
    $region25: #{tpu_custom_call.1} parent=1 // pred_fallthru
      _
    %101 = vsyncpa [#allocation3], 1
    %102 = vsyncpa [#allocation6], 1
    %103 = vsyncpa [#allocation4], 1

</llo_original>
